<compile_context>
chip_gen: v6e
topology: v6e:2x2x1
jax: 0.10.0
libtpu: 0.0.40
codegen_flags: <defaults>
</compile_context>

<pallas_src>
import numpy as np
import jax
import jax.numpy as jnp
from jax import lax
from jax.experimental import pallas as pl
from jax.experimental.pallas import tpu as pltpu


_VMEM_LIMIT_BYTES = 48 * 1024 * 1024    # raised scoped-VMEM cap (still < v7x's 64 MiB)
_VMEM_BUDGET_BYTES = 40 * 1024 * 1024   # target for block sizing (headroom under the cap)


def _pick_block_b(B, T, dim_vid, H, vmem_budget_bytes=_VMEM_BUDGET_BYTES):
    """Batch-tile size shared by both kernels.

    Sized so the double-buffered blocks of BOTH kernels fit the VMEM budget
    (v7x only has 64 MiB); when B is large enough, split into >= 2 tiles so the
    'parallel' grid axis feeds both v7x TensorCores. block_b must be a multiple
    of 8 whenever it does not cover the full batch dim (it is the second-to-last
    dim of the time-major blocks).
    """
    per_row = max(
        2 * (T * dim_vid * 4 + T * 3 * H * 2),            # kernel 1: x f32 in + gi bf16 out
        2 * (T * 3 * H * 2 + T * H * 4) + 2 * H * 4,      # kernel 2: gi bf16 in + out f32 (+ hT)
    )
    cap = max(8, int(vmem_budget_bytes // max(per_row, 1)))
    if B < 16:
        return B                                           # single tile == full batch dim
    bb = min((B + 1) // 2, cap)                            # aim for >= 2 tiles (v7x megacore)
    bb = max(8, (bb // 8) * 8)
    return min(bb, B)


# ---------------------------------------------------------------------------
# Kernel 1: fused input projection, written TIME-MAJOR.
#   gi[t, b, :] = (x[b, t, :] @ W_v2h^T + b_v2h) @ W_ih^T + (b_ih + [b_hr, b_hz, 0])
# One big MXU matmul pair over all rows of the batch tile (bf16 operands, f32
# accumulate), then a per-time-step scatter into the (T, Bb, 3H) output so the
# serial GRU kernel only ever touches dense slabs.
# ---------------------------------------------------------------------------
def _input_gates_kernel(x_ref, w1_ref, b1_ref, w2_ref, b2_ref, gi_ref):
    T, bb, H3 = gi_ref.shape
    x = x_ref[...].astype(jnp.bfloat16)                   # (bb*T, dim_vid), rows (b,t) b-major
    y = jnp.dot(x, w1_ref[...], preferred_element_type=jnp.float32) + b1_ref[...]
    gi = jnp.dot(y.astype(jnp.bfloat16), w2_ref[...],
                 preferred_element_type=jnp.float32) + b2_ref[...]
    # TODO(synk): the leading-dim split below is layout-preserving only for T % 8 == 0
    # (true here and for typical seq lengths); otherwise keep gi 2D and use strided reads.
    gi = gi.reshape(bb, T, H3)                            # f32, free leading-dim split
    for t in range(T):                                    # static scatter, off the serial path
        gi_ref[t] = gi[:, t, :].astype(gi_ref.dtype)      # dense (bb, 3H) time-major store


def input_gates(x_2d, w_v2h_t, b_v2h, w_ih_t, b_gi, *, B, T, block_b):
    dim_vid = x_2d.shape[1]
    H = w_v2h_t.shape[1]
    grid_b = pl.cdiv(B, block_b)
    return pl.pallas_call(
        _input_gates_kernel,
        out_shape=jax.ShapeDtypeStruct((T, B, 3 * H), jnp.bfloat16),
        grid_spec=pltpu.PrefetchScalarGridSpec(
            num_scalar_prefetch=0,
            grid=(grid_b,),
            in_specs=[
                pl.BlockSpec((block_b * T, dim_vid), lambda b: (b, 0)),   # contiguous rows of x
                pl.BlockSpec((dim_vid, H), lambda b: (0, 0)),             # grid-invariant weights
                pl.BlockSpec((1, H), lambda b: (0, 0)),
                pl.BlockSpec((H, 3 * H), lambda b: (0, 0)),
                pl.BlockSpec((1, 3 * H), lambda b: (0, 0)),
            ],
            out_specs=pl.BlockSpec((T, block_b, 3 * H), lambda b: (0, b, 0)),
        ),
        compiler_params=pltpu.CompilerParams(
            dimension_semantics=("parallel",),             # batch tiles -> megacore on v7x
            vmem_limit_bytes=_VMEM_LIMIT_BYTES,
        ),
    )(x_2d, w_v2h_t, b_v2h, w_ih_t, b_gi)


# ---------------------------------------------------------------------------
# Kernel 2: GRU recurrence, whole time loop inside a single kernel invocation.
#   gi_ref : (T, Bb, 3H) bf16, precomputed input gates (time-major)
#   whh_ref: (H, 3H)     bf16, fused hidden->gates weight (h @ W layout), order r,z,n
#   bhn_ref: (1, H)      f32,  b_hn only (b_hr/b_hz already folded into gi)
#   out_ref: (T, Bb, H)  f32,  time-major hidden sequence
#   hT_ref : (Bb, H)     f32,  final hidden state
# ---------------------------------------------------------------------------
def _gru_kernel(gi_ref, whh_ref, bhn_ref, out_ref, hT_ref):
    T, Bb, H3 = gi_ref.shape
    H = H3 // 3
    whh = whh_ref[...]                                     # hoisted out of the serial loop
    b_hn = jnp.broadcast_to(bhn_ref[...], (Bb, H))         # hoisted broadcast (no per-step re-emit)

    def step(t, h):
        gi = gi_ref[t].astype(jnp.float32)                 # dense (Bb, 3H) time-major load
        gh = jnp.dot(h.astype(jnp.bfloat16), whh,          # single fused (Bb,H)@(H,3H) MXU push
                     preferred_element_type=jnp.float32)
        rz = jax.nn.sigmoid(gi[:, :2 * H] + gh[:, :2 * H])  # r and z in one (Bb, 2H) sigmoid
        r = rz[:, :H]
        z = rz[:, H:]
        n = jnp.tanh(gi[:, 2 * H:] + r * (gh[:, 2 * H:] + b_hn))   # PyTorch: r*(Whn h + bhn)
        h_new = (1.0 - z) * n + z * h
        out_ref[t] = h_new.astype(out_ref.dtype)           # dense (Bb, H) time-major store
        return h_new

    h0 = jnp.zeros((Bb, H), jnp.float32)
    hT = lax.fori_loop(0, T, step, h0, unroll=min(T, 8))
    hT_ref[...] = hT                                       # written once


def gru_forward(gi_tm, w_hh_t, b_hn, *, block_b):
    T, B, H3 = gi_tm.shape
    H = H3 // 3
    grid_b = pl.cdiv(B, block_b)
    out_tm, hT = pl.pallas_call(
        _gru_kernel,
        out_shape=(
            jax.ShapeDtypeStruct((T, B, H), jnp.float32),
            jax.ShapeDtypeStruct((B, H), jnp.float32),
        ),
        grid_spec=pltpu.PrefetchScalarGridSpec(
            num_scalar_prefetch=0,
            grid=(grid_b,),
            in_specs=[
                pl.BlockSpec((T, block_b, H3), lambda b: (0, b, 0)),
                pl.BlockSpec((H, H3), lambda b: (0, 0)),    # grid-invariant weight
                pl.BlockSpec((1, H), lambda b: (0, 0)),
            ],
            out_specs=[
                pl.BlockSpec((T, block_b, H), lambda b: (0, b, 0)),
                pl.BlockSpec((block_b, H), lambda b: (b, 0)),
            ],
        ),
        compiler_params=pltpu.CompilerParams(
            dimension_semantics=("parallel",),              # independent batch tiles -> 2 TCs on v7x
            vmem_limit_bytes=_VMEM_LIMIT_BYTES,
        ),
    )(gi_tm, w_hh_t, b_hn)
    return out_tm, hT


# ---------------------------------------------------------------------------
# Parameter handling
# ---------------------------------------------------------------------------
def init_params(key, dim_vid, dim_hidden):
    """Raw parameters in PyTorch layout (gate order r, z, n)."""
    H = dim_hidden
    k = jax.random.split(key, 5)
    xavier_std = float(np.sqrt(2.0 / (dim_vid + H)))
    bound = 1.0 / float(np.sqrt(H))
    return {
        "w_v2h": xavier_std * jax.random.normal(k[0], (H, dim_vid), jnp.float32),
        "b_v2h": jnp.zeros((H,), jnp.float32),
        "w_ih": jax.random.uniform(k[1], (3 * H, H), jnp.float32, -bound, bound),
        "w_hh": jax.random.uniform(k[2], (3 * H, H), jnp.float32, -bound, bound),
        "b_ih": jax.random.uniform(k[3], (3 * H,), jnp.float32, -bound, bound),
        "b_hh": jax.random.uniform(k[4], (3 * H,), jnp.float32, -bound, bound),
    }


def prepare_params(raw):
    """One-time weight pre-transposition / bf16 cast / bias folding (build time, not per call)."""
    H = raw["w_v2h"].shape[0]
    # Fold the r/z parts of b_hh into the input-side bias; b_hn must stay (multiplied by r).
    b_gi = raw["b_ih"] + jnp.concatenate(
        [raw["b_hh"][:2 * H], jnp.zeros((H,), jnp.float32)])
    return {
        "w_v2h_t": jnp.asarray(raw["w_v2h"].T, jnp.bfloat16),           # (dim_vid, H)
        "b_v2h": jnp.asarray(raw["b_v2h"].reshape(1, H), jnp.float32),
        "w_ih_t": jnp.asarray(raw["w_ih"].T, jnp.bfloat16),             # (H, 3H)
        "b_gi": jnp.asarray(b_gi.reshape(1, 3 * H), jnp.float32),
        "w_hh_t": jnp.asarray(raw["w_hh"].T, jnp.bfloat16),             # (H, 3H)
        "b_hn": jnp.asarray(raw["b_hh"][2 * H:].reshape(1, H), jnp.float32),
    }


# ---------------------------------------------------------------------------
# Full EncoderRNN forward (Pallas hot path)
# ---------------------------------------------------------------------------
def encoder_rnn_forward(vid_feats, prepped):
    B, T, dim_vid = vid_feats.shape
    H = prepped["w_v2h_t"].shape[1]
    block_b = _pick_block_b(B, T, dim_vid, H)

    x_2d = vid_feats.reshape(B * T, dim_vid)               # free reshape, rows are (b, t) b-major
    # input_dropout: identity in eval mode (inference semantics).
    gi_tm = input_gates(x_2d, prepped["w_v2h_t"], prepped["b_v2h"],
                        prepped["w_ih_t"], prepped["b_gi"],
                        B=B, T=T, block_b=block_b)          # (T, B, 3H) bf16, time-major
    out_tm, hT = gru_forward(gi_tm, prepped["w_hh_t"], prepped["b_hn"],
                             block_b=block_b)               # (T, B, H), (B, H)
    out = jnp.transpose(out_tm, (1, 0, 2))                  # one parallel XLA transpose -> batch-first
    return out, hT[None]                                    # hidden: (1, B, H)


# ---------------------------------------------------------------------------
# Pure-JAX f32 reference (mirrors the PyTorch module step by step, raw params)
# ---------------------------------------------------------------------------
def encoder_rnn_reference(vid_feats, raw):
    B, T, dim_vid = vid_feats.shape
    H = raw["w_v2h"].shape[0]
    y = vid_feats.reshape(-1, dim_vid) @ raw["w_v2h"].T + raw["b_v2h"]
    x = y.reshape(B, T, H)
    w_ih, w_hh = raw["w_ih"], raw["w_hh"]
    b_ih, b_hh = raw["b_ih"], raw["b_hh"]

    def step(h, x_t):
        gi = x_t @ w_ih.T + b_ih
        gh = h @ w_hh.T + b_hh
        r = jax.nn.sigmoid(gi[:, :H] + gh[:, :H])
        z = jax.nn.sigmoid(gi[:, H:2 * H] + gh[:, H:2 * H])
        n = jnp.tanh(gi[:, 2 * H:] + r * gh[:, 2 * H:])
        h_new = (1.0 - z) * n + z * h
        return h_new, h_new

    h0 = jnp.zeros((B, H), jnp.float32)
    hT, outs = lax.scan(step, h0, jnp.transpose(x, (1, 0, 2)))
    return jnp.transpose(outs, (1, 0, 2)), hT[None]


if __name__ == "__main__":
    B, T, dim_vid, dim_hidden = 2, 8, 16, 32
    key = jax.random.PRNGKey(0)
    kx, kp = jax.random.split(key)

    vid_feats = jax.random.normal(kx, (B, T, dim_vid), jnp.float32)
    raw_params = init_params(kp, dim_vid, dim_hidden)
    prepped = prepare_params(raw_params)

    output, hidden = encoder_rnn_forward(vid_feats, prepped)
    output, hidden = jax.block_until_ready((output, hidden))

    ref_out, ref_hid = encoder_rnn_reference(vid_feats, raw_params)
    assert output.shape == (B, T, dim_hidden)
    assert hidden.shape == (1, B, dim_hidden)
    # bf16 MXU operands / bf16 gi vs f32 reference -> relaxed tolerance.
    np.testing.assert_allclose(np.asarray(output), np.asarray(ref_out), rtol=3e-2, atol=3e-2)
    np.testing.assert_allclose(np.asarray(hidden), np.asarray(ref_hid), rtol=3e-2, atol=3e-2)

    print("KERNEL_OK")
</pallas_src>

<mosaic_0001>
module attributes {stable_mosaic.version = 11 : i64} {
  func.func @_input_gates_kernel(%arg0: i32, %arg1: memref<16x16xf32, #tpu.memory_space<vmem>>, %arg2: memref<16x32xbf16, #tpu.memory_space<vmem>>, %arg3: memref<1x32xf32, #tpu.memory_space<vmem>>, %arg4: memref<32x96xbf16, #tpu.memory_space<vmem>>, %arg5: memref<1x96xf32, #tpu.memory_space<vmem>>, %arg6: memref<8x2x96xbf16, #tpu.memory_space<vmem>>) attributes {dimension_semantics = [#tpu.dimension_semantics<parallel>], iteration_bounds = array<i64: 1>, scalar_prefetch = 0 : i64, scratch_operands = 0 : i64, tpu.core_type = #tpu.core_type<tc>, window_params = [{transform_indices = @transform_0, window_bounds = array<i64: 16, 16>}, {pipeline_mode = #tpu.pipeline_mode<synchronous>, transform_indices = @transform_1, window_bounds = array<i64: 16, 32>}, {pipeline_mode = #tpu.pipeline_mode<synchronous>, transform_indices = @transform_2, window_bounds = array<i64: 1, 32>}, {pipeline_mode = #tpu.pipeline_mode<synchronous>, transform_indices = @transform_3, window_bounds = array<i64: 32, 96>}, {pipeline_mode = #tpu.pipeline_mode<synchronous>, transform_indices = @transform_4, window_bounds = array<i64: 1, 96>}, {transform_indices = @transform_5, window_bounds = array<i64: 8, 2, 96>}]} {
    %c0 = arith.constant 0 : index
    %c0_0 = arith.constant 0 : index
    %0 = vector.load %arg1[%c0, %c0_0] : memref<16x16xf32, #tpu.memory_space<vmem>>, vector<16x16xf32>
    %1 = arith.truncf %0 : vector<16x16xf32> to vector<16x16xbf16>
    %c0_1 = arith.constant 0 : index
    %c0_2 = arith.constant 0 : index
    %2 = vector.load %arg2[%c0_1, %c0_2] : memref<16x32xbf16, #tpu.memory_space<vmem>>, vector<16x32xbf16>
    %cst = arith.constant dense<0.000000e+00> : vector<16x32xf32>
    %3 = tpu.matmul %1, %2, %cst {dimension_numbers = #tpu.dot_dimension_numbers<[1], [0], [0], [1], [0, 0, 1, 1], [], []>} : vector<16x16xbf16>, vector<16x32xbf16>, vector<16x32xf32> -> vector<16x32xf32>
    %c0_3 = arith.constant 0 : index
    %c0_4 = arith.constant 0 : index
    %4 = vector.load %arg3[%c0_3, %c0_4] : memref<1x32xf32, #tpu.memory_space<vmem>>, vector<1x32xf32>
    %5 = vector.broadcast %4 : vector<1x32xf32> to vector<16x32xf32>
    %6 = arith.addf %3, %5 : vector<16x32xf32>
    %7 = arith.truncf %6 : vector<16x32xf32> to vector<16x32xbf16>
    %c0_5 = arith.constant 0 : index
    %c0_6 = arith.constant 0 : index
    %8 = vector.load %arg4[%c0_5, %c0_6] : memref<32x96xbf16, #tpu.memory_space<vmem>>, vector<32x96xbf16>
    %cst_7 = arith.constant dense<0.000000e+00> : vector<16x96xf32>
    %9 = tpu.matmul %7, %8, %cst_7 {dimension_numbers = #tpu.dot_dimension_numbers<[1], [0], [0], [1], [0, 0, 1, 1], [], []>} : vector<16x32xbf16>, vector<32x96xbf16>, vector<16x96xf32> -> vector<16x96xf32>
    %c0_8 = arith.constant 0 : index
    %c0_9 = arith.constant 0 : index
    %10 = vector.load %arg5[%c0_8, %c0_9] : memref<1x96xf32, #tpu.memory_space<vmem>>, vector<1x96xf32>
    %11 = vector.broadcast %10 : vector<1x96xf32> to vector<16x96xf32>
    %12 = arith.addf %9, %11 : vector<16x96xf32>
    %13 = vector.shape_cast %12 : vector<16x96xf32> to vector<2x8x96xf32>
    %14 = vector.extract_strided_slice %13 {offsets = [0, 0, 0], sizes = [2, 1, 96], strides = [1, 1, 1]} : vector<2x8x96xf32> to vector<2x1x96xf32>
    %15 = vector.shape_cast %14 : vector<2x1x96xf32> to vector<2x96xf32>
    %16 = arith.truncf %15 : vector<2x96xf32> to vector<2x96xbf16>
    %c0_10 = arith.constant 0 : index
    %c0_11 = arith.constant 0 : index
    %c0_12 = arith.constant 0 : index
    %17 = vector.load %arg6[%c0_10, %c0_11, %c0_12] : memref<8x2x96xbf16, #tpu.memory_space<vmem>>, vector<1x2x96xbf16>
    %18 = vector.shape_cast %17 : vector<1x2x96xbf16> to vector<2x96xbf16>
    %19 = vector.shape_cast %16 : vector<2x96xbf16> to vector<1x2x96xbf16>
    tpu.vector_store %arg6[%c0_10, %c0_11, %c0_12], %19 {strides = array<i32>} : memref<8x2x96xbf16, #tpu.memory_space<vmem>>, vector<1x2x96xbf16>,
    %20 = vector.extract_strided_slice %13 {offsets = [0, 1, 0], sizes = [2, 1, 96], strides = [1, 1, 1]} : vector<2x8x96xf32> to vector<2x1x96xf32>
    %21 = vector.shape_cast %20 : vector<2x1x96xf32> to vector<2x96xf32>
    %22 = arith.truncf %21 : vector<2x96xf32> to vector<2x96xbf16>
    %c1 = arith.constant 1 : index
    %c0_13 = arith.constant 0 : index
    %c0_14 = arith.constant 0 : index
    %23 = vector.load %arg6[%c1, %c0_13, %c0_14] : memref<8x2x96xbf16, #tpu.memory_space<vmem>>, vector<1x2x96xbf16>
    %24 = vector.shape_cast %23 : vector<1x2x96xbf16> to vector<2x96xbf16>
    %25 = vector.shape_cast %22 : vector<2x96xbf16> to vector<1x2x96xbf16>
    tpu.vector_store %arg6[%c1, %c0_13, %c0_14], %25 {strides = array<i32>} : memref<8x2x96xbf16, #tpu.memory_space<vmem>>, vector<1x2x96xbf16>,
    %26 = vector.extract_strided_slice %13 {offsets = [0, 2, 0], sizes = [2, 1, 96], strides = [1, 1, 1]} : vector<2x8x96xf32> to vector<2x1x96xf32>
    %27 = vector.shape_cast %26 : vector<2x1x96xf32> to vector<2x96xf32>
    %28 = arith.truncf %27 : vector<2x96xf32> to vector<2x96xbf16>
    %c2 = arith.constant 2 : index
    %c0_15 = arith.constant 0 : index
    %c0_16 = arith.constant 0 : index
    %29 = vector.load %arg6[%c2, %c0_15, %c0_16] : memref<8x2x96xbf16, #tpu.memory_space<vmem>>, vector<1x2x96xbf16>
    %30 = vector.shape_cast %29 : vector<1x2x96xbf16> to vector<2x96xbf16>
    %31 = vector.shape_cast %28 : vector<2x96xbf16> to vector<1x2x96xbf16>
    tpu.vector_store %arg6[%c2, %c0_15, %c0_16], %31 {strides = array<i32>} : memref<8x2x96xbf16, #tpu.memory_space<vmem>>, vector<1x2x96xbf16>,
    %32 = vector.extract_strided_slice %13 {offsets = [0, 3, 0], sizes = [2, 1, 96], strides = [1, 1, 1]} : vector<2x8x96xf32> to vector<2x1x96xf32>
    %33 = vector.shape_cast %32 : vector<2x1x96xf32> to vector<2x96xf32>
    %34 = arith.truncf %33 : vector<2x96xf32> to vector<2x96xbf16>
    %c3 = arith.constant 3 : index
    %c0_17 = arith.constant 0 : index
    %c0_18 = arith.constant 0 : index
    %35 = vector.load %arg6[%c3, %c0_17, %c0_18] : memref<8x2x96xbf16, #tpu.memory_space<vmem>>, vector<1x2x96xbf16>
    %36 = vector.shape_cast %35 : vector<1x2x96xbf16> to vector<2x96xbf16>
    %37 = vector.shape_cast %34 : vector<2x96xbf16> to vector<1x2x96xbf16>
    tpu.vector_store %arg6[%c3, %c0_17, %c0_18], %37 {strides = array<i32>} : memref<8x2x96xbf16, #tpu.memory_space<vmem>>, vector<1x2x96xbf16>,
    %38 = vector.extract_strided_slice %13 {offsets = [0, 4, 0], sizes = [2, 1, 96], strides = [1, 1, 1]} : vector<2x8x96xf32> to vector<2x1x96xf32>
    %39 = vector.shape_cast %38 : vector<2x1x96xf32> to vector<2x96xf32>
    %40 = arith.truncf %39 : vector<2x96xf32> to vector<2x96xbf16>
    %c4 = arith.constant 4 : index
    %c0_19 = arith.constant 0 : index
    %c0_20 = arith.constant 0 : index
    %41 = vector.load %arg6[%c4, %c0_19, %c0_20] : memref<8x2x96xbf16, #tpu.memory_space<vmem>>, vector<1x2x96xbf16>
    %42 = vector.shape_cast %41 : vector<1x2x96xbf16> to vector<2x96xbf16>
    %43 = vector.shape_cast %40 : vector<2x96xbf16> to vector<1x2x96xbf16>
    tpu.vector_store %arg6[%c4, %c0_19, %c0_20], %43 {strides = array<i32>} : memref<8x2x96xbf16, #tpu.memory_space<vmem>>, vector<1x2x96xbf16>,
    %44 = vector.extract_strided_slice %13 {offsets = [0, 5, 0], sizes = [2, 1, 96], strides = [1, 1, 1]} : vector<2x8x96xf32> to vector<2x1x96xf32>
    %45 = vector.shape_cast %44 : vector<2x1x96xf32> to vector<2x96xf32>
    %46 = arith.truncf %45 : vector<2x96xf32> to vector<2x96xbf16>
    %c5 = arith.constant 5 : index
    %c0_21 = arith.constant 0 : index
    %c0_22 = arith.constant 0 : index
    %47 = vector.load %arg6[%c5, %c0_21, %c0_22] : memref<8x2x96xbf16, #tpu.memory_space<vmem>>, vector<1x2x96xbf16>
    %48 = vector.shape_cast %47 : vector<1x2x96xbf16> to vector<2x96xbf16>
    %49 = vector.shape_cast %46 : vector<2x96xbf16> to vector<1x2x96xbf16>
    tpu.vector_store %arg6[%c5, %c0_21, %c0_22], %49 {strides = array<i32>} : memref<8x2x96xbf16, #tpu.memory_space<vmem>>, vector<1x2x96xbf16>,
    %50 = vector.extract_strided_slice %13 {offsets = [0, 6, 0], sizes = [2, 1, 96], strides = [1, 1, 1]} : vector<2x8x96xf32> to vector<2x1x96xf32>
    %51 = vector.shape_cast %50 : vector<2x1x96xf32> to vector<2x96xf32>
    %52 = arith.truncf %51 : vector<2x96xf32> to vector<2x96xbf16>
    %c6 = arith.constant 6 : index
    %c0_23 = arith.constant 0 : index
    %c0_24 = arith.constant 0 : index
    %53 = vector.load %arg6[%c6, %c0_23, %c0_24] : memref<8x2x96xbf16, #tpu.memory_space<vmem>>, vector<1x2x96xbf16>
    %54 = vector.shape_cast %53 : vector<1x2x96xbf16> to vector<2x96xbf16>
    %55 = vector.shape_cast %52 : vector<2x96xbf16> to vector<1x2x96xbf16>
    tpu.vector_store %arg6[%c6, %c0_23, %c0_24], %55 {strides = array<i32>} : memref<8x2x96xbf16, #tpu.memory_space<vmem>>, vector<1x2x96xbf16>,
    %56 = vector.extract_strided_slice %13 {offsets = [0, 7, 0], sizes = [2, 1, 96], strides = [1, 1, 1]} : vector<2x8x96xf32> to vector<2x1x96xf32>
    %57 = vector.shape_cast %56 : vector<2x1x96xf32> to vector<2x96xf32>
    %58 = arith.truncf %57 : vector<2x96xf32> to vector<2x96xbf16>
    %c7 = arith.constant 7 : index
    %c0_25 = arith.constant 0 : index
    %c0_26 = arith.constant 0 : index
    %59 = vector.load %arg6[%c7, %c0_25, %c0_26] : memref<8x2x96xbf16, #tpu.memory_space<vmem>>, vector<1x2x96xbf16>
    %60 = vector.shape_cast %59 : vector<1x2x96xbf16> to vector<2x96xbf16>
    %61 = vector.shape_cast %58 : vector<2x96xbf16> to vector<1x2x96xbf16>
    tpu.vector_store %arg6[%c7, %c0_25, %c0_26], %61 {strides = array<i32>} : memref<8x2x96xbf16, #tpu.memory_space<vmem>>, vector<1x2x96xbf16>,
    return
  }
  func.func @transform_0(%arg0: i32) -> (i32, i32) {
    %c0_i32 = arith.constant 0 : i32
    %c0_i32_0 = arith.constant 0 : i32
    return %arg0, %c0_i32 : i32, i32
  }
  func.func @transform_1(%arg0: i32) -> (i32, i32) {
    %c0_i32 = arith.constant 0 : i32
    %c0_i32_0 = arith.constant 0 : i32
    %c0_i32_1 = arith.constant 0 : i32
    return %c0_i32, %c0_i32_0 : i32, i32
  }
  func.func @transform_2(%arg0: i32) -> (i32, i32) {
    %c0_i32 = arith.constant 0 : i32
    %c0_i32_0 = arith.constant 0 : i32
    %c0_i32_1 = arith.constant 0 : i32
    return %c0_i32, %c0_i32_0 : i32, i32
  }
  func.func @transform_3(%arg0: i32) -> (i32, i32) {
    %c0_i32 = arith.constant 0 : i32
    %c0_i32_0 = arith.constant 0 : i32
    %c0_i32_1 = arith.constant 0 : i32
    return %c0_i32, %c0_i32_0 : i32, i32
  }
  func.func @transform_4(%arg0: i32) -> (i32, i32) {
    %c0_i32 = arith.constant 0 : i32
    %c0_i32_0 = arith.constant 0 : i32
    %c0_i32_1 = arith.constant 0 : i32
    return %c0_i32, %c0_i32_0 : i32, i32
  }
  func.func @transform_5(%arg0: i32) -> (i32, i32, i32) {
    %c0_i32 = arith.constant 0 : i32
    %c0_i32_0 = arith.constant 0 : i32
    %c0_i32_1 = arith.constant 0 : i32
    return %c0_i32, %arg0, %c0_i32_0 : i32, i32, i32
  }
}

</mosaic_0001>

<llo_original>
// kernel: tpu_custom_call.1
$region0: #{tpu_custom_call.1}
  #allocation0 [shape = 'u32[]', space=smem, size = 0x4, offset = 0x4, fixed_abs, tag = 'smem constant byte address 0x4 - core index']
  #allocation1 [shape = 'u32[144,128]{1,0:T(1,128)}', space=vmem, size = 0x12000, scoped, tag = 'internal scratch']
  %s0 = inlined_call_operand.hbm [shape: f32[16,16], index: 0, kind: input, shape index: {}]
  %s1 = inlined_call_operand.hbm [shape: bf16[16,32], index: 1, kind: input, shape index: {}]
  %s2 = inlined_call_operand.vmem [shape: f32[1,32], index: 2, kind: input, shape index: {}]
  %s3 = inlined_call_operand.hbm [shape: bf16[32,96], index: 3, kind: input, shape index: {}]
  %s4 = inlined_call_operand.vmem [shape: f32[1,96], index: 4, kind: input, shape index: {}]
  %s5 = inlined_call_operand.hbm [shape: bf16[8,2,96], index: 5, kind: output, shape index: {}]
  %s6 = sld [smem:[#allocation0]]
  $region42: #{tpu_custom_call.1} parent=0
    _
  %s8 = ssub.s32 1, %s6
  %s9 = scalar_select 0, %s8, %s6
  $region1: #{tpu_custom_call.1} parent=0
    #allocation2 [shape = 'u8[8192]{0}', space=vmem, size = 0x2000, scoped, tag = 'input window, operand 0, single buffered']
    #allocation3 [shape = 's32[1]{0}', space=sflag, size = 0x4, scoped, tag = 'scoped memory for tpu_custom_call.1']
    #allocation4 [shape = 's32[1]{0}', space=sflag, size = 0x4, scoped, tag = 'scoped memory for tpu_custom_call.1']
    #allocation5 [shape = 'u8[4096]{0}', space=vmem, size = 0x1000, scoped, tag = 'input window, operand 1, single buffered']
    #allocation6 [shape = 's32[1]{0}', space=sflag, size = 0x4, scoped, tag = 'scoped memory for tpu_custom_call.1']
    #allocation7 [shape = 'u8[8192]{0}', space=vmem, size = 0x2000, scoped, tag = 'input window, operand 3, single buffered']
    #allocation8 [shape = 'u8[4096]{0}', space=vmem, size = 0x1000, scoped, tag = 'output window, operand 0, single buffered']
    %10 = vsyncpa [#allocation3], 0
    %11 = vsyncpa [#allocation6], 0
    %12 = vsyncpa [#allocation4], 0
    // Predicated region
    $region2: #{tpu_custom_call.1} parent=1 // pred_check
      _
    $region3: #{tpu_custom_call.1} parent=1 // pred_check_branch
      %14 = sbr.rel (0) target = $region5
    $region4: #{tpu_custom_call.1} parent=1 // pred_region
      %s16 = ssub.s32 256, 256
      %17 = vsyncadd [#allocation3], %s16
      %s18 = sshll.u32 [#allocation2], 4
      %s19 = int_to_ptr.vmem [resolvable:$true] %s18
      %24 = dma.hbm_to_vmem [thread:$0]  %s0, 256, %s19, [#allocation3], 128, 128, 8
    $region5: #{tpu_custom_call.1} parent=1 // pred_fallthru
      _
    // Predicated region
    $region6: #{tpu_custom_call.1} parent=1 // pred_check
      _
    $region7: #{tpu_custom_call.1} parent=1 // pred_check_branch
      %26 = sbr.rel (0) target = $region9
    $region8: #{tpu_custom_call.1} parent=1 // pred_region
      %s28 = ssub.s32 128, 128
      %29 = vsyncadd [#allocation6], %s28
      %s30 = sshll.u32 [#allocation5], 4
      %s31 = int_to_ptr.vmem [resolvable:$true] %s30
      %36 = dma.hbm_to_vmem [thread:$0]  %s1, 128, %s31, [#allocation6], 64, 64, 4
    $region9: #{tpu_custom_call.1} parent=1 // pred_fallthru
      _
    // Predicated region
    $region10: #{tpu_custom_call.1} parent=1 // pred_check
      _
    $region11: #{tpu_custom_call.1} parent=1 // pred_check_branch
      %38 = sbr.rel (0) target = $region13
    $region12: #{tpu_custom_call.1} parent=1 // pred_region
      _
    $region13: #{tpu_custom_call.1} parent=1 // pred_fallthru
      _
    // Predicated region
    $region14: #{tpu_custom_call.1} parent=1 // pred_check
      _
    $region15: #{tpu_custom_call.1} parent=1 // pred_check_branch
      %40 = sbr.rel (0) target = $region17
    $region16: #{tpu_custom_call.1} parent=1 // pred_region
      %s42 = ssub.s32 256, 256
      %43 = vsyncadd [#allocation6], %s42
      %s44 = sshll.u32 [#allocation7], 4
      %s45 = int_to_ptr.vmem [resolvable:$true] %s44
      %50 = dma.hbm_to_vmem [thread:$0]  %s3, 256, %s45, [#allocation6], 64, 64, 4
    $region17: #{tpu_custom_call.1} parent=1 // pred_fallthru
      _
    // Predicated region
    $region18: #{tpu_custom_call.1} parent=1 // pred_check
      _
    $region19: #{tpu_custom_call.1} parent=1 // pred_check_branch
      %52 = sbr.rel (0) target = $region21
    $region20: #{tpu_custom_call.1} parent=1 // pred_region
      _
    $region21: #{tpu_custom_call.1} parent=1 // pred_fallthru
      _
    // Predicated region
    $region22: #{tpu_custom_call.1} parent=1 // pred_check
      _
    $region23: #{tpu_custom_call.1} parent=1 // pred_check_branch
      %54 = sbr.rel (0) target = $region25
    $region24: #{tpu_custom_call.1} parent=1 // pred_region
      %55 = dma.done [#allocation3], 256
    $region25: #{tpu_custom_call.1} parent=1 // pred_fallthru
      _
    // Predicated region
    $region26: #{tpu_custom_call.1} parent=1 // pred_check
      _
    $region27: #{tpu_custom_call.1} parent=1 // pred_check_branch
      %57 = sbr.rel (0) target = $region29
    $region28: #{tpu_custom_call.1} parent=1 // pred_region
      %58 = dma.done [#allocation6], 128
    $region29: #{tpu_custom_call.1} parent=1 // pred_fallthru
      _
    // Predicated region
    $region30: #{tpu_custom_call.1} parent=1 // pred_check
      _
    $region31: #{tpu_custom_call.1} parent=1 // pred_check_branch
      %60 = sbr.rel (0) target = $region33
    $region32: #{tpu_custom_call.1} parent=1 // pred_region
      %61 = dma.done [#allocation6], 256
    $region33: #{tpu_custom_call.1} parent=1 // pred_fallthru
      _
    %v63 = vld [vmem:[#allocation2] sm:$0xff]
    %v64 = vld [vmem:[#allocation2 + $0x8] sm:$0xff]
    %v65 = vpack.c.bf16 %v64, %v63
    %v66 = vld [vmem:[#allocation5] sm:$0xf]
    %v67 = vld [vmem:[#allocation5 + $0x4] sm:$0xf]
    %v68 = vld [vmem:[%s2] sm:$0x1]
    %v70 = vlaneseq
    %v71 = vshrl.u32 %v70, 7
    %v72 = vsub.s32 0, %v71
    %v73 = vrot.slane %v68, %v72
    %v77 = vunpack.c.l.b16 %v66
    %v78 = vunpack.c.l.b16 %v67
    %v79 = vpack.c.b16 %v78, %v77
    %vm81 = vcmask 130048
    %v83 = vsel %vm81, %v65, 0
    %85 = vmatprep.subr.bf16.mxu0 0
    %86 = vmatpush1.bf16.msra.mxu0 0
    %87 = vmatprep.subr.bf16.mxu0 0
    %88 = vmatpush1.bf16.msra.mxu0 0
    %89 = vmatprep.subr.bf16.mxu0 0
    %90 = vmatpush1.bf16.msra.mxu0 0
    %91 = vmatprep.subr.bf16.mxu0 0
    %92 = vmatpush1.bf16.msra.mxu0 0
    %93 = vmatprep.subr.bf16.mxu0 0
    %94 = vmatpush1.bf16.msra.mxu0 0
    %95 = vmatprep.subr.bf16.mxu0 0
    %96 = vmatpush1.bf16.msra.mxu0 0
    %97 = vmatprep.subr.bf16.mxu0 0
    %98 = vmatpush1.bf16.msra.mxu0 0
    %99 = vmatprep.subr.bf16.mxu0 0
    %100 = vmatpush1.bf16.msra.mxu0 %v79
    %101 = vmatprep.subr.bf16.mxu0 0
    %102 = vmatpush2.bf16.msra.mxu0 0
    %103 = vmatprep.subr.bf16.mxu0 0
    %104 = vmatpush2.bf16.msra.mxu0 0
    %105 = vmatprep.subr.bf16.mxu0 0
    %106 = vmatpush2.bf16.msra.mxu0 0
    %107 = vmatprep.subr.bf16.mxu0 0
    %108 = vmatpush2.bf16.msra.mxu0 0
    %109 = vmatprep.subr.bf16.mxu0 0
    %110 = vmatpush2.bf16.msra.mxu0 0
    %111 = vmatprep.subr.bf16.mxu0 0
    %112 = vmatpush2.bf16.msra.mxu0 0
    %113 = vmatprep.subr.bf16.mxu0 0
    %114 = vmatpush2.bf16.msra.mxu0 0
    %115 = vmatprep.subr.bf16.mxu0 0
    %116 = vmatpush2.bf16.msra.mxu0 0
    %117 = vmatprep.mubr.bf16.mxu0 0
    %118 = vmatmul.mubr.bf16.gmra.mxu0 %v83
    %v119 = vpop.f32.mrf.mxu0
    %v120 = vadd.f32 %v73, %v119
    %v121 = vpop.f32.mrf.mxu0
    %v122 = vpop.f32.mrf.mxu0
    %v123 = vadd.f32 %v73, %v122
    %v124 = vpop.f32.mrf.mxu0
    %125 = vdwg.mxu0
    %v126 = vpack.c.bf16 %v123, %v120
    %v127 = vld [vmem:[#allocation7] sm:$0xf]
    %v128 = vld [vmem:[#allocation7 + $0x4] sm:$0xf]
    %v129 = vld [vmem:[#allocation7 + $0x8] sm:$0xf]
    %v130 = vld [vmem:[#allocation7 + $0xc] sm:$0xf]
    %v131 = vld [vmem:[%s4] sm:$0x1]
    %v133 = vlaneseq
    %v134 = vshrl.u32 %v133, 7
    %v135 = vsub.s32 0, %v134
    %v136 = vrot.slane %v131, %v135
    %v142 = vunpack.c.l.b16 %v127
    %v143 = vunpack.c.l.b16 %v128
    %v144 = vunpack.c.l.b16 %v129
    %v145 = vunpack.c.l.b16 %v130
    %v146 = vpack.c.b16 %v143, %v142
    %v147 = vpack.c.b16 %v145, %v144
    %vm150 = vcmask 261120
    %v152 = vsel %vm150, %v126, 0
    %154 = vmatprep.subr.bf16.mxu0 0
    %155 = vmatpush1.bf16.msra.mxu0 0
    %156 = vmatprep.subr.bf16.mxu0 0
    %157 = vmatpush1.bf16.msra.mxu0 0
    %158 = vmatprep.subr.bf16.mxu0 0
    %159 = vmatpush1.bf16.msra.mxu0 0
    %160 = vmatprep.subr.bf16.mxu0 0
    %161 = vmatpush1.bf16.msra.mxu0 0
    %162 = vmatprep.subr.bf16.mxu0 0
    %163 = vmatpush1.bf16.msra.mxu0 0
    %164 = vmatprep.subr.bf16.mxu0 0
    %165 = vmatpush1.bf16.msra.mxu0 0
    %166 = vmatprep.subr.bf16.mxu0 0
    %167 = vmatpush1.bf16.msra.mxu0 %v147
    %168 = vmatprep.subr.bf16.mxu0 0
    %169 = vmatpush1.bf16.msra.mxu0 %v146
    %170 = vmatprep.subr.bf16.mxu0 0
    %171 = vmatpush2.bf16.msra.mxu0 0
    %172 = vmatprep.subr.bf16.mxu0 0
    %173 = vmatpush2.bf16.msra.mxu0 0
    %174 = vmatprep.subr.bf16.mxu0 0
    %175 = vmatpush2.bf16.msra.mxu0 0
    %176 = vmatprep.subr.bf16.mxu0 0
    %177 = vmatpush2.bf16.msra.mxu0 0
    %178 = vmatprep.subr.bf16.mxu0 0
    %179 = vmatpush2.bf16.msra.mxu0 0
    %180 = vmatprep.subr.bf16.mxu0 0
    %181 = vmatpush2.bf16.msra.mxu0 0
    %182 = vmatprep.subr.bf16.mxu0 0
    %183 = vmatpush2.bf16.msra.mxu0 0
    %184 = vmatprep.subr.bf16.mxu0 0
    %185 = vmatpush2.bf16.msra.mxu0 0
    %186 = vmatprep.mubr.bf16.mxu0 0
    %187 = vmatmul.mubr.bf16.gmra.mxu0 %v152
    %v188 = vpop.f32.mrf.mxu0
    %v189 = vadd.f32 %v136, %v188
    %v190 = vpop.f32.mrf.mxu0
    %v191 = vpop.f32.mrf.mxu0
    %v192 = vadd.f32 %v136, %v191
    %v193 = vpop.f32.mrf.mxu0
    %194 = vdwg.mxu0
    %v195 = vpack.c.bf16 %v189, %v189
    %v196 = vpack.c.bf16 %v192, %v192
    %v200 = vunpack.c.l.s4 1966171168
    %v201 = vunpack.c.0.s8 %v200
    %v202 = vlaneseq
    %v203 = vshrl.u32 %v202, 7
    %v204 = vsub.s32 %v201, %v203
    %v205 = vrot.slane %v195, %v204
    %v207 = vunpack.c.l.s4 1966171168
    %v208 = vunpack.c.0.s8 %v207
    %v209 = vlaneseq
    %v210 = vshrl.u32 %v209, 7
    %v211 = vsub.s32 %v208, %v210
    %v212 = vrot.slane %v205, %v211
    %v214 = vunpack.c.l.s4 1966171168
    %v215 = vunpack.c.0.s8 %v214
    %v216 = vlaneseq
    %v217 = vshrl.u32 %v216, 7
    %v218 = vsub.s32 %v215, %v217
    %v219 = vrot.slane %v196, %v218
    %v221 = vunpack.c.l.s4 1966171168
    %v222 = vunpack.c.0.s8 %v221
    %v223 = vlaneseq
    %v224 = vshrl.u32 %v223, 7
    %v225 = vsub.s32 %v222, %v224
    %v226 = vrot.slane %v219, %v225
    %v228 = vunpack.c.l.s4 1935823168
    %v229 = vunpack.c.0.s8 %v228
    %v230 = vlaneseq
    %v231 = vshrl.u32 %v230, 7
    %v232 = vsub.s32 %v229, %v231
    %v233 = vrot.slane %v212, %v232
    %v235 = vunpack.c.l.s4 1935823168
    %v236 = vunpack.c.0.s8 %v235
    %v237 = vlaneseq
    %v238 = vshrl.u32 %v237, 7
    %v239 = vsub.s32 %v236, %v238
    %v240 = vrot.slane %v233, %v239
    %v242 = vunpack.c.l.s4 1935823168
    %v243 = vunpack.c.0.s8 %v242
    %v244 = vlaneseq
    %v245 = vshrl.u32 %v244, 7
    %v246 = vsub.s32 %v243, %v245
    %v247 = vrot.slane %v226, %v246
    %v249 = vunpack.c.l.s4 1935823168
    %v250 = vunpack.c.0.s8 %v249
    %v251 = vlaneseq
    %v252 = vshrl.u32 %v251, 7
    %v253 = vsub.s32 %v250, %v252
    %v254 = vrot.slane %v247, %v253
    %v255 = vunpack.c.l.b16 %v240
    %v256 = vunpack.c.l.b16 %v254
    %v257 = vrot.slane %v256, 7
    %vm258 = vcmask 1041409
    %v259 = vsel %vm258, %v257, %v255
    %v260 = vpack.c.b16 %v259, %v259
    %v262 = vunpack.c.l.s4 1966171168
    %v263 = vunpack.c.0.s8 %v262
    %v264 = vlaneseq
    %v265 = vshrl.u32 %v264, 7
    %v266 = vsub.s32 %v263, %v265
    %v267 = vrot.slane %v260, %v266
    %v269 = vunpack.c.l.s4 1966171168
    %v270 = vunpack.c.0.s8 %v269
    %v271 = vlaneseq
    %v272 = vshrl.u32 %v271, 7
    %v273 = vsub.s32 %v270, %v272
    %v274 = vrot.slane %v267, %v273
    %vm276 = vcmask 778240
    %277 = vst.msk [vmem:[#allocation8] sm:$0x1] %vm276, %v274
    %v278 = vrot.slane %v255, 1
    %v279 = vsel %vm258, %v256, %v278
    %v280 = vpack.c.b16 %v279, %v279
    %v282 = vunpack.c.l.s4 1966171168
    %v283 = vunpack.c.0.s8 %v282
    %v284 = vlaneseq
    %v285 = vshrl.u32 %v284, 7
    %v286 = vsub.s32 %v283, %v285
    %v287 = vrot.slane %v280, %v286
    %v289 = vunpack.c.l.s4 1966171168
    %v290 = vunpack.c.0.s8 %v289
    %v291 = vlaneseq
    %v292 = vshrl.u32 %v291, 7
    %v293 = vsub.s32 %v290, %v292
    %v294 = vrot.slane %v287, %v293
    %s296 = scalar_lea.vmem [#allocation8], 1
    %297 = vst.msk [vmem:[%s296] sm:$0x1] %vm276, %v294
    %v298 = vcombine.high %v205, %v205
    %v300 = vunpack.c.l.s4 1966171168
    %v301 = vunpack.c.0.s8 %v300
    %v302 = vlaneseq
    %v303 = vshrl.u32 %v302, 7
    %v304 = vsub.s32 %v301, %v303
    %v305 = vrot.slane %v298, %v304
    %v306 = vcombine.high %v219, %v219
    %v308 = vunpack.c.l.s4 1966171168
    %v309 = vunpack.c.0.s8 %v308
    %v310 = vlaneseq
    %v311 = vshrl.u32 %v310, 7
    %v312 = vsub.s32 %v309, %v311
    %v313 = vrot.slane %v306, %v312
    %v315 = vunpack.c.l.s4 1935823168
    %v316 = vunpack.c.0.s8 %v315
    %v317 = vlaneseq
    %v318 = vshrl.u32 %v317, 7
    %v319 = vsub.s32 %v316, %v318
    %v320 = vrot.slane %v305, %v319
    %v322 = vunpack.c.l.s4 1935823168
    %v323 = vunpack.c.0.s8 %v322
    %v324 = vlaneseq
    %v325 = vshrl.u32 %v324, 7
    %v326 = vsub.s32 %v323, %v325
    %v327 = vrot.slane %v320, %v326
    %v329 = vunpack.c.l.s4 1935823168
    %v330 = vunpack.c.0.s8 %v329
    %v331 = vlaneseq
    %v332 = vshrl.u32 %v331, 7
    %v333 = vsub.s32 %v330, %v332
    %v334 = vrot.slane %v313, %v333
    %v336 = vunpack.c.l.s4 1935823168
    %v337 = vunpack.c.0.s8 %v336
    %v338 = vlaneseq
    %v339 = vshrl.u32 %v338, 7
    %v340 = vsub.s32 %v337, %v339
    %v341 = vrot.slane %v334, %v340
    %v342 = vunpack.c.l.b16 %v327
    %v343 = vunpack.c.l.b16 %v341
    %v344 = vrot.slane %v343, 7
    %v345 = vsel %vm258, %v344, %v342
    %v346 = vpack.c.b16 %v345, %v345
    %v348 = vunpack.c.l.s4 1966171168
    %v349 = vunpack.c.0.s8 %v348
    %v350 = vlaneseq
    %v351 = vshrl.u32 %v350, 7
    %v352 = vsub.s32 %v349, %v351
    %v353 = vrot.slane %v346, %v352
    %v355 = vunpack.c.l.s4 1966171168
    %v356 = vunpack.c.0.s8 %v355
    %v357 = vlaneseq
    %v358 = vshrl.u32 %v357, 7
    %v359 = vsub.s32 %v356, %v358
    %v360 = vrot.slane %v353, %v359
    %s362 = scalar_lea.vmem [#allocation8], 2
    %363 = vst.msk [vmem:[%s362] sm:$0x1] %vm276, %v360
    %v364 = vrot.slane %v342, 1
    %v365 = vsel %vm258, %v343, %v364
    %v366 = vpack.c.b16 %v365, %v365
    %v368 = vunpack.c.l.s4 1966171168
    %v369 = vunpack.c.0.s8 %v368
    %v370 = vlaneseq
    %v371 = vshrl.u32 %v370, 7
    %v372 = vsub.s32 %v369, %v371
    %v373 = vrot.slane %v366, %v372
    %v375 = vunpack.c.l.s4 1966171168
    %v376 = vunpack.c.0.s8 %v375
    %v377 = vlaneseq
    %v378 = vshrl.u32 %v377, 7
    %v379 = vsub.s32 %v376, %v378
    %v380 = vrot.slane %v373, %v379
    %s382 = scalar_lea.vmem [#allocation8], 3
    %383 = vst.msk [vmem:[%s382] sm:$0x1] %vm276, %v380
    %v384 = vcombine.high %v212, %v212
    %v385 = vcombine.high %v226, %v226
    %v387 = vunpack.c.l.s4 1935823168
    %v388 = vunpack.c.0.s8 %v387
    %v389 = vlaneseq
    %v390 = vshrl.u32 %v389, 7
    %v391 = vsub.s32 %v388, %v390
    %v392 = vrot.slane %v384, %v391
    %v394 = vunpack.c.l.s4 1935823168
    %v395 = vunpack.c.0.s8 %v394
    %v396 = vlaneseq
    %v397 = vshrl.u32 %v396, 7
    %v398 = vsub.s32 %v395, %v397
    %v399 = vrot.slane %v392, %v398
    %v401 = vunpack.c.l.s4 1935823168
    %v402 = vunpack.c.0.s8 %v401
    %v403 = vlaneseq
    %v404 = vshrl.u32 %v403, 7
    %v405 = vsub.s32 %v402, %v404
    %v406 = vrot.slane %v385, %v405
    %v408 = vunpack.c.l.s4 1935823168
    %v409 = vunpack.c.0.s8 %v408
    %v410 = vlaneseq
    %v411 = vshrl.u32 %v410, 7
    %v412 = vsub.s32 %v409, %v411
    %v413 = vrot.slane %v406, %v412
    %v414 = vunpack.c.l.b16 %v399
    %v415 = vunpack.c.l.b16 %v413
    %v416 = vrot.slane %v415, 7
    %v417 = vsel %vm258, %v416, %v414
    %v418 = vpack.c.b16 %v417, %v417
    %v420 = vunpack.c.l.s4 1966171168
    %v421 = vunpack.c.0.s8 %v420
    %v422 = vlaneseq
    %v423 = vshrl.u32 %v422, 7
    %v424 = vsub.s32 %v421, %v423
    %v425 = vrot.slane %v418, %v424
    %v427 = vunpack.c.l.s4 1966171168
    %v428 = vunpack.c.0.s8 %v427
    %v429 = vlaneseq
    %v430 = vshrl.u32 %v429, 7
    %v431 = vsub.s32 %v428, %v430
    %v432 = vrot.slane %v425, %v431
    %s434 = scalar_lea.vmem [#allocation8], 4
    %435 = vst.msk [vmem:[%s434] sm:$0x1] %vm276, %v432
    %v436 = vrot.slane %v414, 1
    %v437 = vsel %vm258, %v415, %v436
    %v438 = vpack.c.b16 %v437, %v437
    %v440 = vunpack.c.l.s4 1966171168
    %v441 = vunpack.c.0.s8 %v440
    %v442 = vlaneseq
    %v443 = vshrl.u32 %v442, 7
    %v444 = vsub.s32 %v441, %v443
    %v445 = vrot.slane %v438, %v444
    %v447 = vunpack.c.l.s4 1966171168
    %v448 = vunpack.c.0.s8 %v447
    %v449 = vlaneseq
    %v450 = vshrl.u32 %v449, 7
    %v451 = vsub.s32 %v448, %v450
    %v452 = vrot.slane %v445, %v451
    %s454 = scalar_lea.vmem [#allocation8], 5
    %455 = vst.msk [vmem:[%s454] sm:$0x1] %vm276, %v452
    %v456 = vcombine.high %v305, %v305
    %v457 = vcombine.high %v313, %v313
    %v459 = vunpack.c.l.s4 1935823168
    %v460 = vunpack.c.0.s8 %v459
    %v461 = vlaneseq
    %v462 = vshrl.u32 %v461, 7
    %v463 = vsub.s32 %v460, %v462
    %v464 = vrot.slane %v456, %v463
    %v466 = vunpack.c.l.s4 1935823168
    %v467 = vunpack.c.0.s8 %v466
    %v468 = vlaneseq
    %v469 = vshrl.u32 %v468, 7
    %v470 = vsub.s32 %v467, %v469
    %v471 = vrot.slane %v464, %v470
    %v473 = vunpack.c.l.s4 1935823168
    %v474 = vunpack.c.0.s8 %v473
    %v475 = vlaneseq
    %v476 = vshrl.u32 %v475, 7
    %v477 = vsub.s32 %v474, %v476
    %v478 = vrot.slane %v457, %v477
    %v480 = vunpack.c.l.s4 1935823168
    %v481 = vunpack.c.0.s8 %v480
    %v482 = vlaneseq
    %v483 = vshrl.u32 %v482, 7
    %v484 = vsub.s32 %v481, %v483
    %v485 = vrot.slane %v478, %v484
    %v486 = vunpack.c.l.b16 %v471
    %v487 = vunpack.c.l.b16 %v485
    %v488 = vrot.slane %v487, 7
    %v489 = vsel %vm258, %v488, %v486
    %v490 = vpack.c.b16 %v489, %v489
    %v492 = vunpack.c.l.s4 1966171168
    %v493 = vunpack.c.0.s8 %v492
    %v494 = vlaneseq
    %v495 = vshrl.u32 %v494, 7
    %v496 = vsub.s32 %v493, %v495
    %v497 = vrot.slane %v490, %v496
    %v499 = vunpack.c.l.s4 1966171168
    %v500 = vunpack.c.0.s8 %v499
    %v501 = vlaneseq
    %v502 = vshrl.u32 %v501, 7
    %v503 = vsub.s32 %v500, %v502
    %v504 = vrot.slane %v497, %v503
    %s506 = scalar_lea.vmem [#allocation8], 6
    %507 = vst.msk [vmem:[%s506] sm:$0x1] %vm276, %v504
    %v508 = vrot.slane %v486, 1
    %v509 = vsel %vm258, %v487, %v508
    %v510 = vpack.c.b16 %v509, %v509
    %v512 = vunpack.c.l.s4 1966171168
    %v513 = vunpack.c.0.s8 %v512
    %v514 = vlaneseq
    %v515 = vshrl.u32 %v514, 7
    %v516 = vsub.s32 %v513, %v515
    %v517 = vrot.slane %v510, %v516
    %v519 = vunpack.c.l.s4 1966171168
    %v520 = vunpack.c.0.s8 %v519
    %v521 = vlaneseq
    %v522 = vshrl.u32 %v521, 7
    %v523 = vsub.s32 %v520, %v522
    %v524 = vrot.slane %v517, %v523
    %s526 = scalar_lea.vmem [#allocation8], 7
    %527 = vst.msk [vmem:[%s526] sm:$0x1] %vm276, %v524
    // Predicated region
    $region34: #{tpu_custom_call.1} parent=1 // pred_check
      _
    $region35: #{tpu_custom_call.1} parent=1 // pred_check_branch
      %529 = sbr.rel (0) target = $region37
    $region36: #{tpu_custom_call.1} parent=1 // pred_region
      %s531 = ssub.s32 128, 128
      %532 = vsyncadd [#allocation4], %s531
      %s533 = sshll.u32 [#allocation8], 4
      %s534 = int_to_ptr.vmem [resolvable:$true] %s533
      %539 = dma.vmem_to_hbm [thread:$0]  %s534, 128, %s5, [#allocation4], 16, 16, 1
    $region37: #{tpu_custom_call.1} parent=1 // pred_fallthru
      _
    // Predicated region
    $region38: #{tpu_custom_call.1} parent=1 // pred_check
      _
    $region39: #{tpu_custom_call.1} parent=1 // pred_check_branch
      %541 = sbr.rel (0) target = $region41
    $region40: #{tpu_custom_call.1} parent=1 // pred_region
      %542 = dma.done [#allocation4], 128
    $region41: #{tpu_custom_call.1} parent=1 // pred_fallthru
      _
    %543 = vsyncpa [#allocation3], 1
    %544 = vsyncpa [#allocation6], 1
    %545 = vsyncpa [#allocation4], 1

</llo_original>
